<compile_context>
chip_gen: v5e
topology: v5e:2x2
jax: 0.10.0
libtpu: 0.0.40
codegen_flags: <defaults>
</compile_context>

<pallas_src>
import functools

import jax
import jax.numpy as jnp
from jax import lax
from jax.experimental import pallas as pl
from jax.experimental.pallas import tpu as pltpu


def _round_up(a, b):
    return ((a + b - 1) // b) * b


def _vmem_budget_bytes():
    """~80% of per-core VMEM (headroom for compiler scratch / hidden buffers)."""
    cap = 64 * 1024 * 1024                       # conservative default (v7x-sized)
    try:
        info = pltpu.get_tpu_info()
        cap = int(getattr(info, "vmem_capacity_bytes", cap)) or cap
    except Exception:
        pass
    return int(cap * 0.8)


def _supports_single_buffer():
    try:
        pl.BlockSpec((8, 128), lambda i: (0, 0), pipeline_mode=pl.Buffered(1))
        return True
    except Exception:
        return False


def _const_spec(block_shape, index_map, single_buffer):
    """BlockSpec for a grid-invariant operand; single-buffered when supported."""
    if single_buffer:
        try:
            return pl.BlockSpec(block_shape, index_map,
                                pipeline_mode=pl.Buffered(1))
        except Exception:                         # older jax: no pipeline_mode
            pass
    return pl.BlockSpec(block_shape, index_map)


# ----------------------------- Pallas kernels --------------------------------
def _merge_reduce_norm_kernel(x_ref, w_ref, g_ref, b_ref, o_ref, *,
                              kh_steps, inv_d, eps, pad_cols):
    # Fast path (regroup fused, whole weight resident, no K grid axis):
    #   x_ref : (G, kH, Wg, kW*C) f32   activation slab (contiguous DMA)
    #   w_ref : (kH, kW*C, OUT_PAD) bf16  VMEM-resident reduction weight
    #   g_ref : (1, OUT_PAD) f32  LayerNorm gamma (zero-padded)
    #   b_ref : (1, OUT_PAD) f32  LayerNorm beta  (zero-padded)
    #   o_ref : (G*Wg, OUT_PAD) bf16  lane-dense output tile
    rows, _ = o_ref.shape
    kwc = x_ref.shape[-1]

    # Reshape the f32 slab first (free when Wg % 8 == 0), then cast for the MXU.
    xk = x_ref[:, 0, :, :].reshape(rows, kwc).astype(jnp.bfloat16)
    y = jnp.dot(xk, w_ref[0], preferred_element_type=jnp.float32)
    for kh in range(1, kh_steps):
        xk = x_ref[:, kh, :, :].reshape(rows, kwc).astype(jnp.bfloat16)
        y = y + jnp.dot(xk, w_ref[kh], preferred_element_type=jnp.float32)

    # Two-pass LayerNorm over the REAL out_dim. Padding columns of y are exact
    # zeros (zero weight columns): the pad_cols*mean^2 term removes their
    # (0 - mean)^2 contribution from the variance sum.
    mean = jnp.sum(y, axis=-1, keepdims=True) * inv_d
    d = y - mean
    var = (jnp.sum(d * d, axis=-1, keepdims=True)
           - pad_cols * mean * mean) * inv_d
    var = jnp.maximum(var, 0.0)
    o_ref[...] = (d * lax.rsqrt(var + eps) * g_ref[...]
                  + b_ref[...]).astype(o_ref.dtype)


def _reduce_norm_split_kernel(x_ref, w_ref, g_ref, b_ref, o_ref, acc_ref, *,
                              inv_d, eps, pad_cols):
    # Fallback path (pre-regrouped activations, K possibly split):
    #   x_ref  : (TM, TK) bf16 ; w_ref : (TK, OUT_PAD) bf16
    #   o_ref  : (TM, OUT_PAD) bf16 ; acc_ref : (TM, OUT_PAD) f32 scratch
    k = pl.program_id(1)

    @pl.when(k == 0)
    def _():
        acc_ref[...] = jnp.zeros_like(acc_ref)

    acc_ref[...] += jnp.dot(x_ref[...], w_ref[...],
                            preferred_element_type=jnp.float32)

    @pl.when(k == pl.num_programs(1) - 1)
    def _():
        y = acc_ref[...]
        mean = jnp.sum(y, axis=-1, keepdims=True) * inv_d
        d = y - mean
        var = jnp.maximum((jnp.sum(d * d, axis=-1, keepdims=True)
                           - pad_cols * mean * mean) * inv_d, 0.0)
        o_ref[...] = (d * lax.rsqrt(var + eps) * g_ref[...]
                      + b_ref[...]).astype(o_ref.dtype)


# ----------------------------- pallas_call wrappers ---------------------------
def _fused_call(x4, wt3, g2, b2, *, group, out_dim, eps, vmem_limit,
                single_buffer):
    n_groups, k_h, w_g, kwc = x4.shape
    out_pad = wt3.shape[-1]
    rows = group * w_g
    n_blocks = n_groups // group
    kernel = functools.partial(
        _merge_reduce_norm_kernel, kh_steps=k_h, inv_d=1.0 / out_dim, eps=eps,
        pad_cols=float(out_pad - out_dim))
    return pl.pallas_call(
        kernel,
        out_shape=jax.ShapeDtypeStruct((n_blocks * rows, out_pad), jnp.bfloat16),
        grid_spec=pltpu.PrefetchScalarGridSpec(
            num_scalar_prefetch=0,
            grid=(n_blocks,),
            in_specs=[
                pl.BlockSpec((group, k_h, w_g, kwc), lambda i: (i, 0, 0, 0)),
                _const_spec((k_h, kwc, out_pad), lambda i: (0, 0, 0),
                            single_buffer),
                _const_spec((1, out_pad), lambda i: (0, 0), single_buffer),
                _const_spec((1, out_pad), lambda i: (0, 0), single_buffer),
            ],
            out_specs=pl.BlockSpec((rows, out_pad), lambda i: (i, 0)),
        ),
        compiler_params=pltpu.CompilerParams(
            dimension_semantics=("parallel",),
            vmem_limit_bytes=vmem_limit),
    )(x4, wt3, g2, b2)


def _split_call(x2d, wt2, g2, b2, *, tm, tk, out_dim, eps, vmem_limit,
                single_buffer):
    n, in_dim = x2d.shape
    out_pad = wt2.shape[-1]
    k_steps = in_dim // tk
    n_pad = _round_up(n, tm)
    if n_pad != n:
        x2d = jnp.pad(x2d, ((0, n_pad - n), (0, 0)))   # zero rows, sliced off later
    kernel = functools.partial(
        _reduce_norm_split_kernel, inv_d=1.0 / out_dim, eps=eps,
        pad_cols=float(out_pad - out_dim))
    if k_steps == 1:
        w_spec = _const_spec((tk, out_pad), lambda i, k: (0, 0), single_buffer)
    else:
        w_spec = pl.BlockSpec((tk, out_pad), lambda i, k: (k, 0))
    out = pl.pallas_call(
        kernel,
        out_shape=jax.ShapeDtypeStruct((n_pad, out_pad), jnp.bfloat16),
        grid_spec=pltpu.PrefetchScalarGridSpec(
            num_scalar_prefetch=0,
            grid=(n_pad // tm, k_steps),
            in_specs=[
                pl.BlockSpec((tm, tk), lambda i, k: (i, k)),
                w_spec,
                _const_spec((1, out_pad), lambda i, k: (0, 0), single_buffer),
                _const_spec((1, out_pad), lambda i, k: (0, 0), single_buffer),
            ],
            out_specs=pl.BlockSpec((tm, out_pad), lambda i, k: (i, 0)),
            scratch_shapes=[pltpu.VMEM((tm, out_pad), jnp.float32)],
        ),
        compiler_params=pltpu.CompilerParams(
            dimension_semantics=("parallel", "arbitrary"),
            vmem_limit_bytes=vmem_limit),
    )(x2d, wt2, g2, b2)
    return out[:n]


# ------------------------------ Module wrapper --------------------------------
class PatchMergingRevised:
    """JAX/Pallas port of PatchMerging_revised (reduce_dim=True path).

    Matmul inputs and the returned activations are bf16 (accumulation and the
    LayerNorm statistics stay f32) — the precision/bandwidth tradeoff from the
    perf review; pass out_dtype=jnp.float32 to get an f32 result instead.
    """

    def __init__(self, input_resolution, dim, stride, *, reduce_dim=True,
                 key=jax.random.PRNGKey(0), out_dtype=jnp.bfloat16):
        self.input_resolution = input_resolution
        self.dim = dim
        if isinstance(stride, int):
            stride = (stride, stride)
        self.kH, self.kW = stride
        self.k = max(self.kH, self.kW)
        in_features = self.kH * self.kW * dim
        out_features = (self.k ** 2 * dim // 2) if reduce_dim else dim
        self.in_features = in_features
        self.out_features = out_features
        self.eps = 1e-5
        self.out_dtype = out_dtype

        # nn.Linear-like init (no bias), torch (out, in) layout with the
        # torch-unfold (C, kH, kW) in-feature ordering (used by the reference).
        bound = 1.0 / float(in_features) ** 0.5
        self.weight = jax.random.uniform(
            key, (out_features, in_features), jnp.float32, -bound, bound)
        self.gamma = jnp.ones((out_features,), jnp.float32)
        self.beta = jnp.zeros((out_features,), jnp.float32)

        # ---- one-time parameter prep (off the call path) ----
        # Permute in-features from torch-unfold (C,kH,kW) to natural (kH,kW,C),
        # transpose to (in, out), pad out-features to a 128-lane multiple, bf16.
        out_pad = _round_up(out_features, 128)
        self.out_pad = out_pad
        w4 = self.weight.reshape(out_features, dim, self.kH, self.kW)   # (O,C,kH,kW)
        wt_nat = jnp.transpose(w4, (2, 3, 1, 0)).reshape(in_features, out_features)
        wt_nat = jnp.pad(wt_nat, ((0, 0), (0, out_pad - out_features)))
        self._wt2 = wt_nat.astype(jnp.bfloat16)                         # (in, out_pad)
        self._wt3 = self._wt2.reshape(self.kH, self.kW * dim, out_pad)  # (kH,kW*C,out_pad)
        self._gamma2 = jnp.pad(self.gamma, (0, out_pad - out_features)
                               ).reshape(1, out_pad).astype(jnp.float32)
        self._beta2 = jnp.pad(self.beta, (0, out_pad - out_features)
                              ).reshape(1, out_pad).astype(jnp.float32)

        self._budget = _vmem_budget_bytes()
        self._rows_target = 1024 if self._budget >= 96 * 1024 * 1024 else 512
        self._single_buf = _supports_single_buffer()
        self._w_bufs = 1 if self._single_buf else 2

    # ---- host-side planning (static shapes only) ----
    def _fused_plan(self, n_groups, w_g):
        """Largest group count G (dividing n_groups) s.t. the whole weight plus
        tiles fit the VMEM budget; None => use the fallback path."""
        if w_g % 8 != 0:      # in-kernel (G,Wg,kWC)->(G*Wg,kWC) must be layout-free
            return None
        in_dim, out_pad = self.in_features, self.out_pad
        w_bytes = self._w_bufs * in_dim * out_pad * 2

        def need(rows):
            b = (w_bytes
                 + 2 * rows * in_dim * 4          # x (f32) double-buffered
                 + 2 * rows * out_pad * 2         # bf16 output double-buffered
                 + 3 * rows * out_pad * 4         # f32 acc / LN temporaries
                 + rows * in_dim * 2              # bf16 slab copies
                 + 8 * out_pad * 4)
            return int(b * 1.15) + (1 << 20)

        best = best16 = None
        for g in range(1, n_groups + 1):
            if n_groups % g:
                continue
            rows = g * w_g
            if rows > self._rows_target and best is not None:
                break
            if need(rows) <= self._budget:
                best = g
                if rows % 16 == 0:
                    best16 = g                    # bf16-store-friendly row count
            if rows >= self._rows_target:
                break
        if best is None:
            return None
        if best16 is not None and 2 * best16 >= best:
            best = best16
        limit = min(self._budget, max(32 * 1024 * 1024, need(best * w_g)))
        return best, limit

    def _split_plan(self):
        """(tm, tk, vmem_limit) for the regrouped fallback path."""
        in_dim, out_pad = self.in_features, self.out_pad
        tks = [in_dim]
        for mult in (256, 128):                   # prefer 256-multiples (v7x MXU)
            tks += sorted((d for d in range(mult, in_dim, mult)
                           if in_dim % d == 0), reverse=True)
        seen, tk_list = set(), []
        for t in tks:
            if t not in seen:
                seen.add(t)
                tk_list.append(t)

        def need(tm, tk, k_steps):
            w_bufs = self._w_bufs if k_steps == 1 else 2
            b = (w_bufs * tk * out_pad * 2
                 + 2 * tm * tk * 2                # bf16 activations
                 + 2 * tm * out_pad * 2           # bf16 output
                 + 3 * tm * out_pad * 4           # f32 acc + LN temporaries
                 + 8 * out_pad * 4)
            return int(b * 1.15) + (1 << 20)

        for tk in tk_list:
            k_steps = in_dim // tk
            for tm in (1024, 512, 256, 128, 64, 32, 16):   # multiples of 16
                if tm > self._rows_target:
                    continue
                n = need(tm, tk, k_steps)
                if n <= self._budget:
                    return tm, tk, min(self._budget, max(32 * 1024 * 1024, n))
        return 16, in_dim, self._budget           # last resort

    def __call__(self, x):
        H, W = self.input_resolution
        B, L, C = x.shape
        assert L == H * W, "input feature has wrong size"
        assert H % self.kH == 0 and W % self.kW == 0, \
            f"x size ({H}*{W}) not divisible by stride"
        kH, kW = self.kH, self.kW
        Hg, Wg = H // kH, W // kW
        n_rows = B * Hg * Wg

        plan = self._fused_plan(B * Hg, Wg)
        if plan is not None:
            group, vmem_limit = plan
            # Free view: (B, H, W, C) == (B*Hg, kH, Wg, kW*C); the regroup happens
            # inside the kernel (no HBM transpose/cast pre-pass).
            x4 = x.reshape(B * Hg, kH, Wg, kW * C)
            out = _fused_call(x4, self._wt3, self._gamma2, self._beta2,
                              group=group, out_dim=self.out_features,
                              eps=self.eps, vmem_limit=vmem_limit,
                              single_buffer=self._single_buf)
        else:
            # Fallback: JAX-side regroup to natural (kH,kW,C) order + bf16 cast,
            # then a (rows, K)-tiled kernel; K split only if the weight exceeds
            # the VMEM budget.
            tm, tk, vmem_limit = self._split_plan()
            xv = x.reshape(B, Hg, kH, Wg, kW, C)
            xv = jnp.transpose(xv, (0, 1, 3, 2, 4, 5))
            merged = xv.reshape(n_rows, kH * kW * C).astype(jnp.bfloat16)
            out = _split_call(merged, self._wt2, self._gamma2, self._beta2,
                              tm=tm, tk=tk, out_dim=self.out_features,
                              eps=self.eps, vmem_limit=vmem_limit,
                              single_buffer=self._single_buf)
        out = out[:, :self.out_features].astype(self.out_dtype)
        return out.reshape(B, Hg * Wg, self.out_features)


# -------------------------------- reference -----------------------------------
def _reference(x, m, *, matmul_dtype=jnp.float32):
    """Pure-JAX reference with torch-unfold (C-major) feature ordering.
    matmul_dtype=bfloat16 only rounds the matmul inputs (accumulation stays f32)."""
    H, W = m.input_resolution
    B, L, C = x.shape
    kH, kW = m.kH, m.kW
    xv = x.reshape(B, H // kH, kH, W // kW, kW, C)
    xv = jnp.transpose(xv, (0, 1, 3, 5, 2, 4)).reshape(B, -1, kH * kW * C)
    xq = xv.astype(matmul_dtype).astype(jnp.float32)
    wq = m.weight.astype(matmul_dtype).astype(jnp.float32)
    y = jnp.einsum("bld,od->blo", xq, wq)
    mean = jnp.mean(y, axis=-1, keepdims=True)
    var = jnp.mean((y - mean) ** 2, axis=-1, keepdims=True)
    yn = (y - mean) / jnp.sqrt(var + m.eps)
    return yn * m.gamma + m.beta


if __name__ == "__main__":
    key = jax.random.PRNGKey(0)
    kx, kw = jax.random.split(key)

    B, H, W, dim, stride = 2, 16, 16, 32, 2          # x: (B, H*W, C) = (2, 256, 32)
    x = jax.random.normal(kx, (B, H * W, dim), jnp.float32)

    module = PatchMergingRevised((H, W), dim, stride, key=kw)
    fwd = jax.jit(module.__call__)
    out = jax.block_until_ready(fwd(x))

    assert out.shape == (B, (H // 2) * (W // 2), (stride ** 2) * dim // 2)
    out_f32 = out.astype(jnp.float32)

    # Strict check vs a reference using the same bf16-rounded matmul inputs
    # (tolerance accounts for the bf16 output store).
    ref_bf16 = _reference(x, module, matmul_dtype=jnp.bfloat16)
    assert jnp.allclose(out_f32, ref_bf16, atol=3e-2, rtol=3e-2), "mismatch (bf16 ref)"
    # Loose sanity check vs the full-f32 reference.
    ref_f32 = _reference(x, module, matmul_dtype=jnp.float32)
    assert jnp.allclose(out_f32, ref_f32, atol=1.2e-1, rtol=1.2e-1), "mismatch (f32 ref)"

    print("KERNEL_OK")
</pallas_src>

<mosaic_0001>
module attributes {stable_mosaic.version = 11 : i64} {
  func.func @_merge_reduce_norm_kernel(%arg0: i32, %arg1: memref<16x2x8x64xf32, #tpu.memory_space<vmem>>, %arg2: memref<2x64x128xbf16, #tpu.memory_space<vmem>>, %arg3: memref<1x128xf32, #tpu.memory_space<vmem>>, %arg4: memref<1x128xf32, #tpu.memory_space<vmem>>, %arg5: memref<128x128xbf16, #tpu.memory_space<vmem>>) attributes {dimension_semantics = [#tpu.dimension_semantics<parallel>], iteration_bounds = array<i64: 1>, scalar_prefetch = 0 : i64, scratch_operands = 0 : i64, tpu.core_type = #tpu.core_type<tc>, window_params = [{transform_indices = @transform_0, window_bounds = array<i64: 16, 2, 8, 64>}, {pipeline_mode = #tpu.pipeline_mode<synchronous>, transform_indices = @transform_1, window_bounds = array<i64: 2, 64, 128>}, {pipeline_mode = #tpu.pipeline_mode<synchronous>, transform_indices = @transform_2, window_bounds = array<i64: 1, 128>}, {pipeline_mode = #tpu.pipeline_mode<synchronous>, transform_indices = @transform_3, window_bounds = array<i64: 1, 128>}, {transform_indices = @transform_4, window_bounds = array<i64: 128, 128>}]} {
    %c0 = arith.constant 0 : index
    %c0_0 = arith.constant 0 : index
    %c0_1 = arith.constant 0 : index
    %c0_2 = arith.constant 0 : index
    %0 = vector.load %arg1[%c0, %c0_0, %c0_1, %c0_2] : memref<16x2x8x64xf32, #tpu.memory_space<vmem>>, vector<16x1x8x64xf32>
    %1 = vector.shape_cast %0 : vector<16x1x8x64xf32> to vector<16x8x64xf32>
    %2 = vector.shape_cast %1 : vector<16x8x64xf32> to vector<128x64xf32>
    %3 = arith.truncf %2 : vector<128x64xf32> to vector<128x64xbf16>
    %c0_3 = arith.constant 0 : index
    %c0_4 = arith.constant 0 : index
    %c0_5 = arith.constant 0 : index
    %4 = vector.load %arg2[%c0_3, %c0_4, %c0_5] : memref<2x64x128xbf16, #tpu.memory_space<vmem>>, vector<1x64x128xbf16>
    %5 = vector.shape_cast %4 : vector<1x64x128xbf16> to vector<64x128xbf16>
    %cst = arith.constant dense<0.000000e+00> : vector<128x128xf32>
    %6 = tpu.matmul %3, %5, %cst {dimension_numbers = #tpu.dot_dimension_numbers<[1], [0], [0], [1], [0, 0, 1, 1], [], []>} : vector<128x64xbf16>, vector<64x128xbf16>, vector<128x128xf32> -> vector<128x128xf32>
    %c0_6 = arith.constant 0 : index
    %c1 = arith.constant 1 : index
    %c0_7 = arith.constant 0 : index
    %c0_8 = arith.constant 0 : index
    %7 = vector.load %arg1[%c0_6, %c1, %c0_7, %c0_8] : memref<16x2x8x64xf32, #tpu.memory_space<vmem>>, vector<16x1x8x64xf32>
    %8 = vector.shape_cast %7 : vector<16x1x8x64xf32> to vector<16x8x64xf32>
    %9 = vector.shape_cast %8 : vector<16x8x64xf32> to vector<128x64xf32>
    %10 = arith.truncf %9 : vector<128x64xf32> to vector<128x64xbf16>
    %c1_9 = arith.constant 1 : index
    %c0_10 = arith.constant 0 : index
    %c0_11 = arith.constant 0 : index
    %11 = vector.load %arg2[%c1_9, %c0_10, %c0_11] : memref<2x64x128xbf16, #tpu.memory_space<vmem>>, vector<1x64x128xbf16>
    %12 = vector.shape_cast %11 : vector<1x64x128xbf16> to vector<64x128xbf16>
    %cst_12 = arith.constant dense<0.000000e+00> : vector<128x128xf32>
    %13 = tpu.matmul %10, %12, %cst_12 {dimension_numbers = #tpu.dot_dimension_numbers<[1], [0], [0], [1], [0, 0, 1, 1], [], []>} : vector<128x64xbf16>, vector<64x128xbf16>, vector<128x128xf32> -> vector<128x128xf32>
    %14 = arith.addf %6, %13 : vector<128x128xf32>
    %cst_13 = arith.constant dense<0.000000e+00> : vector<128xf32>
    %15 = vector.multi_reduction <add>, %14, %cst_13 [1] : vector<128x128xf32> to vector<128xf32>
    %16 = vector.shape_cast %15 : vector<128xf32> to vector<128x1xf32>
    %cst_14 = arith.constant 1.562500e-02 : f32
    %17 = vector.broadcast %cst_14 : f32 to vector<128x1xf32>
    %18 = arith.mulf %16, %17 : vector<128x1xf32>
    %19 = vector.broadcast %18 : vector<128x1xf32> to vector<128x128xf32>
    %20 = arith.subf %14, %19 : vector<128x128xf32>
    %21 = arith.mulf %20, %20 : vector<128x128xf32>
    %cst_15 = arith.constant dense<0.000000e+00> : vector<128xf32>
    %22 = vector.multi_reduction <add>, %21, %cst_15 [1] : vector<128x128xf32> to vector<128xf32>
    %23 = vector.shape_cast %22 : vector<128xf32> to vector<128x1xf32>
    %cst_16 = arith.constant 6.400000e+01 : f32
    %24 = vector.broadcast %cst_16 : f32 to vector<128x1xf32>
    %25 = arith.mulf %24, %18 : vector<128x1xf32>
    %26 = arith.mulf %25, %18 : vector<128x1xf32>
    %27 = arith.subf %23, %26 : vector<128x1xf32>
    %cst_17 = arith.constant 1.562500e-02 : f32
    %28 = vector.broadcast %cst_17 : f32 to vector<128x1xf32>
    %29 = arith.mulf %27, %28 : vector<128x1xf32>
    %cst_18 = arith.constant 0.000000e+00 : f32
    %30 = vector.broadcast %cst_18 : f32 to vector<128x1xf32>
    %31 = arith.maximumf %29, %30 : vector<128x1xf32>
    %cst_19 = arith.constant 9.99999974E-6 : f32
    %32 = vector.broadcast %cst_19 : f32 to vector<128x1xf32>
    %33 = arith.addf %31, %32 : vector<128x1xf32>
    %34 = math.rsqrt %33 : vector<128x1xf32>
    %35 = vector.broadcast %34 : vector<128x1xf32> to vector<128x128xf32>
    %36 = arith.mulf %20, %35 : vector<128x128xf32>
    %c0_20 = arith.constant 0 : index
    %c0_21 = arith.constant 0 : index
    %37 = vector.load %arg3[%c0_20, %c0_21] : memref<1x128xf32, #tpu.memory_space<vmem>>, vector<1x128xf32>
    %38 = vector.broadcast %37 : vector<1x128xf32> to vector<128x128xf32>
    %39 = arith.mulf %36, %38 : vector<128x128xf32>
    %c0_22 = arith.constant 0 : index
    %c0_23 = arith.constant 0 : index
    %40 = vector.load %arg4[%c0_22, %c0_23] : memref<1x128xf32, #tpu.memory_space<vmem>>, vector<1x128xf32>
    %41 = vector.broadcast %40 : vector<1x128xf32> to vector<128x128xf32>
    %42 = arith.addf %39, %41 : vector<128x128xf32>
    %43 = arith.truncf %42 : vector<128x128xf32> to vector<128x128xbf16>
    %c0_24 = arith.constant 0 : index
    %c0_25 = arith.constant 0 : index
    %44 = vector.load %arg5[%c0_24, %c0_25] : memref<128x128xbf16, #tpu.memory_space<vmem>>, vector<128x128xbf16>
    tpu.vector_store %arg5[%c0_24, %c0_25], %43 {strides = array<i32>} : memref<128x128xbf16, #tpu.memory_space<vmem>>, vector<128x128xbf16>,
    return
  }
  func.func @transform_0(%arg0: i32) -> (i32, i32, i32, i32) {
    %c0_i32 = arith.constant 0 : i32
    %c0_i32_0 = arith.constant 0 : i32
    %c0_i32_1 = arith.constant 0 : i32
    %c0_i32_2 = arith.constant 0 : i32
    return %arg0, %c0_i32, %c0_i32_0, %c0_i32_1 : i32, i32, i32, i32
  }
  func.func @transform_1(%arg0: i32) -> (i32, i32, i32) {
    %c0_i32 = arith.constant 0 : i32
    %c0_i32_0 = arith.constant 0 : i32
    %c0_i32_1 = arith.constant 0 : i32
    %c0_i32_2 = arith.constant 0 : i32
    return %c0_i32, %c0_i32_0, %c0_i32_1 : i32, i32, i32
  }
  func.func @transform_2(%arg0: i32) -> (i32, i32) {
    %c0_i32 = arith.constant 0 : i32
    %c0_i32_0 = arith.constant 0 : i32
    %c0_i32_1 = arith.constant 0 : i32
    return %c0_i32, %c0_i32_0 : i32, i32
  }
  func.func @transform_3(%arg0: i32) -> (i32, i32) {
    %c0_i32 = arith.constant 0 : i32
    %c0_i32_0 = arith.constant 0 : i32
    %c0_i32_1 = arith.constant 0 : i32
    return %c0_i32, %c0_i32_0 : i32, i32
  }
  func.func @transform_4(%arg0: i32) -> (i32, i32) {
    %c0_i32 = arith.constant 0 : i32
    %c0_i32_0 = arith.constant 0 : i32
    return %arg0, %c0_i32 : i32, i32
  }
}

</mosaic_0001>

<llo_original>
// kernel: a_call__.1
$region0: #{a_call__.1}
  #allocation0 [shape = 'u32[]', space=smem, size = 0x4, offset = 0x4, fixed_abs, tag = 'smem constant byte address 0x4 - core index']
  #allocation1 [shape = 'u32[72,128]{1,0:T(1,128)}', space=vmem, size = 0x9000, scoped, tag = 'internal scratch']
  %s0 = inlined_call_operand.vmem [shape: f32[16,2,8,64], index: 0, kind: input, shape index: {}]
  %s1 = inlined_call_operand.vmem [shape: bf16[2,64,128], index: 1, kind: input, shape index: {}]
  %s2 = inlined_call_operand.vmem [shape: f32[1,128], index: 2, kind: input, shape index: {}]
  %s3 = inlined_call_operand.vmem [shape: f32[1,128], index: 3, kind: input, shape index: {}]
  %s4 = inlined_call_operand.hbm [shape: bf16[128,128], index: 4, kind: output, shape index: {}]
  %s5 = sld [smem:[#allocation0]]
  $region26: #{a_call__.1} parent=0
    _
  %s7 = ssub.s32 1, %s5
  %s8 = scalar_select 0, %s7, %s5
  $region1: #{a_call__.1} parent=0
    #allocation2 [shape = 'u8[32768]{0}', space=vmem, size = 0x8000, scoped, tag = 'output window, operand 0, single buffered']
    #allocation3 [shape = 's32[1]{0}', space=sflag, size = 0x4, scoped, tag = 'scoped memory for a_call__.1']
    %9 = vsyncpa [#allocation3], 0
    // Predicated region
    $region2: #{a_call__.1} parent=1 // pred_check
      _
    $region3: #{a_call__.1} parent=1 // pred_check_branch
      %11 = sbr.rel (0) target = $region5
    $region4: #{a_call__.1} parent=1 // pred_region
      _
    $region5: #{a_call__.1} parent=1 // pred_fallthru
      _
    // Predicated region
    $region6: #{a_call__.1} parent=1 // pred_check
      _
    $region7: #{a_call__.1} parent=1 // pred_check_branch
      %13 = sbr.rel (0) target = $region9
    $region8: #{a_call__.1} parent=1 // pred_region
      _
    $region9: #{a_call__.1} parent=1 // pred_fallthru
      _
    // Predicated region
    $region10: #{a_call__.1} parent=1 // pred_check
      _
    $region11: #{a_call__.1} parent=1 // pred_check_branch
      %15 = sbr.rel (0) target = $region13
    $region12: #{a_call__.1} parent=1 // pred_region
      _
    $region13: #{a_call__.1} parent=1 // pred_fallthru
      _
    // Predicated region
    $region14: #{a_call__.1} parent=1 // pred_check
      _
    $region15: #{a_call__.1} parent=1 // pred_check_branch
      %17 = sbr.rel (0) target = $region17
    $region16: #{a_call__.1} parent=1 // pred_region
      _
    $region17: #{a_call__.1} parent=1 // pred_fallthru
      _
    %v19 = vld [vmem:[%s0] sm:$0xff]
    %v20 = vld [vmem:[%s0 + $0x10] sm:$0xff]
    %v21 = vld [vmem:[%s0 + $0x20] sm:$0xff]
    %v22 = vld [vmem:[%s0 + $0x30] sm:$0xff]
    %v23 = vld [vmem:[%s0 + $0x40] sm:$0xff]
    %v24 = vld [vmem:[%s0 + $0x50] sm:$0xff]
    %v25 = vld [vmem:[%s0 + $0x60] sm:$0xff]
    %v26 = vld [vmem:[%s0 + $0x70] sm:$0xff]
    %v27 = vld [vmem:[%s0 + $0x80] sm:$0xff]
    %v28 = vld [vmem:[%s0 + $0x90] sm:$0xff]
    %v29 = vld [vmem:[%s0 + $0xa0] sm:$0xff]
    %v30 = vld [vmem:[%s0 + $0xb0] sm:$0xff]
    %v31 = vld [vmem:[%s0 + $0xc0] sm:$0xff]
    %v32 = vld [vmem:[%s0 + $0xd0] sm:$0xff]
    %v33 = vld [vmem:[%s0 + $0xe0] sm:$0xff]
    %v34 = vld [vmem:[%s0 + $0xf0] sm:$0xff]
    %v35 = vpack.c.bf16 %v20, %v19
    %v36 = vpack.c.bf16 %v22, %v21
    %v37 = vpack.c.bf16 %v24, %v23
    %v38 = vpack.c.bf16 %v26, %v25
    %v39 = vpack.c.bf16 %v28, %v27
    %v40 = vpack.c.bf16 %v30, %v29
    %v41 = vpack.c.bf16 %v32, %v31
    %v42 = vpack.c.bf16 %v34, %v33
    %v43 = vld [vmem:[%s1] sm:$0xf]
    %v44 = vld [vmem:[%s1 + $0x4] sm:$0xf]
    %v45 = vld [vmem:[%s1 + $0x8] sm:$0xf]
    %v46 = vld [vmem:[%s1 + $0xc] sm:$0xf]
    %v47 = vld [vmem:[%s1 + $0x10] sm:$0xf]
    %v48 = vld [vmem:[%s1 + $0x14] sm:$0xf]
    %v49 = vld [vmem:[%s1 + $0x18] sm:$0xf]
    %v50 = vld [vmem:[%s1 + $0x1c] sm:$0xf]
    %s51 = scalar_lea.vmem %s0, 8
    %v52 = vld [vmem:[%s51] sm:$0xff]
    %v53 = vld [vmem:[%s51 + $0x10] sm:$0xff]
    %v54 = vld [vmem:[%s51 + $0x20] sm:$0xff]
    %v55 = vld [vmem:[%s51 + $0x30] sm:$0xff]
    %v56 = vld [vmem:[%s51 + $0x40] sm:$0xff]
    %v57 = vld [vmem:[%s51 + $0x50] sm:$0xff]
    %v58 = vld [vmem:[%s51 + $0x60] sm:$0xff]
    %v59 = vld [vmem:[%s51 + $0x70] sm:$0xff]
    %v60 = vld [vmem:[%s51 + $0x80] sm:$0xff]
    %v61 = vld [vmem:[%s51 + $0x90] sm:$0xff]
    %v62 = vld [vmem:[%s51 + $0xa0] sm:$0xff]
    %v63 = vld [vmem:[%s51 + $0xb0] sm:$0xff]
    %v64 = vld [vmem:[%s51 + $0xc0] sm:$0xff]
    %v65 = vld [vmem:[%s51 + $0xd0] sm:$0xff]
    %v66 = vld [vmem:[%s51 + $0xe0] sm:$0xff]
    %v67 = vld [vmem:[%s51 + $0xf0] sm:$0xff]
    %v68 = vpack.c.bf16 %v53, %v52
    %v69 = vpack.c.bf16 %v55, %v54
    %v70 = vpack.c.bf16 %v57, %v56
    %v71 = vpack.c.bf16 %v59, %v58
    %v72 = vpack.c.bf16 %v61, %v60
    %v73 = vpack.c.bf16 %v63, %v62
    %v74 = vpack.c.bf16 %v65, %v64
    %v75 = vpack.c.bf16 %v67, %v66
    %s76 = scalar_lea.vmem %s1, 32
    %v77 = vld [vmem:[%s76] sm:$0xf]
    %v78 = vld [vmem:[%s76 + $0x4] sm:$0xf]
    %v79 = vld [vmem:[%s76 + $0x8] sm:$0xf]
    %v80 = vld [vmem:[%s76 + $0xc] sm:$0xf]
    %v81 = vld [vmem:[%s76 + $0x10] sm:$0xf]
    %v82 = vld [vmem:[%s76 + $0x14] sm:$0xf]
    %v83 = vld [vmem:[%s76 + $0x18] sm:$0xf]
    %v84 = vld [vmem:[%s76 + $0x1c] sm:$0xf]
    %v93 = vunpack.c.l.b16 %v77
    %v94 = vunpack.c.l.b16 %v78
    %v95 = vunpack.c.l.b16 %v79
    %v96 = vunpack.c.l.b16 %v80
    %v97 = vunpack.c.l.b16 %v81
    %v98 = vunpack.c.l.b16 %v82
    %v99 = vunpack.c.l.b16 %v83
    %v100 = vunpack.c.l.b16 %v84
    %v101 = vpack.c.b16 %v94, %v93
    %v102 = vpack.c.b16 %v96, %v95
    %v103 = vpack.c.b16 %v98, %v97
    %v104 = vpack.c.b16 %v100, %v99
    %vm109 = vcmask 523264
    %v111 = vsel %vm109, %v68, 0
    %v114 = vsel %vm109, %v69, 0
    %v117 = vsel %vm109, %v70, 0
    %v120 = vsel %vm109, %v71, 0
    %v123 = vsel %vm109, %v72, 0
    %v126 = vsel %vm109, %v73, 0
    %v129 = vsel %vm109, %v74, 0
    %v132 = vsel %vm109, %v75, 0
    %134 = vmatpush.bf16.msra.mxu0 0
    %135 = vmatpush.bf16.msra.mxu0 0
    %136 = vmatpush.bf16.msra.mxu0 0
    %137 = vmatpush.bf16.msra.mxu0 0
    %138 = vmatpush.bf16.msra.mxu0 %v104
    %139 = vmatpush.bf16.msra.mxu0 %v103
    %140 = vmatpush.bf16.msra.mxu0 %v102
    %141 = vmatpush.bf16.msra.mxu0 %v101
    %142 = vmatmul.bf16.gmra.mxu0 %v111
    %v143 = vpop.f32.mrf.mxu0
    %v144 = vadd.f32 0.0, %v143
    %v145 = vpop.f32.mrf.mxu0
    %v146 = vadd.f32 0.0, %v145
    %147 = vmatmul.bf16.gmra.mxu0 %v114
    %v148 = vpop.f32.mrf.mxu0
    %v149 = vadd.f32 0.0, %v148
    %v150 = vpop.f32.mrf.mxu0
    %v151 = vadd.f32 0.0, %v150
    %152 = vmatmul.bf16.gmra.mxu0 %v117
    %v153 = vpop.f32.mrf.mxu0
    %v154 = vadd.f32 0.0, %v153
    %v155 = vpop.f32.mrf.mxu0
    %v156 = vadd.f32 0.0, %v155
    %157 = vmatmul.bf16.gmra.mxu0 %v120
    %v158 = vpop.f32.mrf.mxu0
    %v159 = vadd.f32 0.0, %v158
    %v160 = vpop.f32.mrf.mxu0
    %v161 = vadd.f32 0.0, %v160
    %162 = vmatmul.bf16.gmra.mxu0 %v123
    %v163 = vpop.f32.mrf.mxu0
    %v164 = vadd.f32 0.0, %v163
    %v165 = vpop.f32.mrf.mxu0
    %v166 = vadd.f32 0.0, %v165
    %167 = vmatmul.bf16.gmra.mxu0 %v126
    %v168 = vpop.f32.mrf.mxu0
    %v169 = vadd.f32 0.0, %v168
    %v170 = vpop.f32.mrf.mxu0
    %v171 = vadd.f32 0.0, %v170
    %172 = vmatmul.bf16.gmra.mxu0 %v129
    %v173 = vpop.f32.mrf.mxu0
    %v174 = vadd.f32 0.0, %v173
    %v175 = vpop.f32.mrf.mxu0
    %v176 = vadd.f32 0.0, %v175
    %177 = vmatmul.bf16.gmra.mxu0 %v132
    %v178 = vpop.f32.mrf.mxu0
    %v179 = vadd.f32 0.0, %v178
    %v180 = vpop.f32.mrf.mxu0
    %v181 = vadd.f32 0.0, %v180
    %182 = vdwg.mxu0
    %v191 = vunpack.c.l.b16 %v43
    %v192 = vunpack.c.l.b16 %v44
    %v193 = vunpack.c.l.b16 %v45
    %v194 = vunpack.c.l.b16 %v46
    %v195 = vunpack.c.l.b16 %v47
    %v196 = vunpack.c.l.b16 %v48
    %v197 = vunpack.c.l.b16 %v49
    %v198 = vunpack.c.l.b16 %v50
    %v199 = vpack.c.b16 %v192, %v191
    %v200 = vpack.c.b16 %v194, %v193
    %v201 = vpack.c.b16 %v196, %v195
    %v202 = vpack.c.b16 %v198, %v197
    %v208 = vsel %vm109, %v35, 0
    %v211 = vsel %vm109, %v36, 0
    %v214 = vsel %vm109, %v37, 0
    %v217 = vsel %vm109, %v38, 0
    %v220 = vsel %vm109, %v39, 0
    %v223 = vsel %vm109, %v40, 0
    %v226 = vsel %vm109, %v41, 0
    %v229 = vsel %vm109, %v42, 0
    %231 = vmatpush.bf16.msra.mxu0 0
    %232 = vmatpush.bf16.msra.mxu0 0
    %233 = vmatpush.bf16.msra.mxu0 0
    %234 = vmatpush.bf16.msra.mxu0 0
    %235 = vmatpush.bf16.msra.mxu0 %v202
    %236 = vmatpush.bf16.msra.mxu0 %v201
    %237 = vmatpush.bf16.msra.mxu0 %v200
    %238 = vmatpush.bf16.msra.mxu0 %v199
    %239 = vmatmul.bf16.gmra.mxu0 %v208
    %v240 = vpop.f32.mrf.mxu0
    %v241 = vadd.f32 %v144, %v240
    %v242 = vpop.f32.mrf.mxu0
    %v243 = vadd.f32 %v146, %v242
    %244 = vmatmul.bf16.gmra.mxu0 %v211
    %v245 = vpop.f32.mrf.mxu0
    %v246 = vadd.f32 %v149, %v245
    %v247 = vpop.f32.mrf.mxu0
    %v248 = vadd.f32 %v151, %v247
    %249 = vmatmul.bf16.gmra.mxu0 %v214
    %v250 = vpop.f32.mrf.mxu0
    %v251 = vadd.f32 %v154, %v250
    %v252 = vpop.f32.mrf.mxu0
    %v253 = vadd.f32 %v156, %v252
    %254 = vmatmul.bf16.gmra.mxu0 %v217
    %v255 = vpop.f32.mrf.mxu0
    %v256 = vadd.f32 %v159, %v255
    %v257 = vpop.f32.mrf.mxu0
    %v258 = vadd.f32 %v161, %v257
    %259 = vmatmul.bf16.gmra.mxu0 %v220
    %v260 = vpop.f32.mrf.mxu0
    %v261 = vadd.f32 %v164, %v260
    %v262 = vpop.f32.mrf.mxu0
    %v263 = vadd.f32 %v166, %v262
    %264 = vmatmul.bf16.gmra.mxu0 %v223
    %v265 = vpop.f32.mrf.mxu0
    %v266 = vadd.f32 %v169, %v265
    %v267 = vpop.f32.mrf.mxu0
    %v268 = vadd.f32 %v171, %v267
    %269 = vmatmul.bf16.gmra.mxu0 %v226
    %v270 = vpop.f32.mrf.mxu0
    %v271 = vadd.f32 %v174, %v270
    %v272 = vpop.f32.mrf.mxu0
    %v273 = vadd.f32 %v176, %v272
    %274 = vmatmul.bf16.gmra.mxu0 %v229
    %v275 = vpop.f32.mrf.mxu0
    %v276 = vadd.f32 %v179, %v275
    %v277 = vpop.f32.mrf.mxu0
    %v278 = vadd.f32 %v181, %v277
    %279 = vdwg.mxu0
    %280 = vadd.xlane.f32.xlu0 %v241
    %v281 = vpop.xlane.xlu0 %280
    %282 = vadd.xlane.f32.xlu0 %v243
    %v283 = vpop.xlane.xlu0 %282
    %284 = vadd.xlane.f32.xlu0 %v246
    %v285 = vpop.xlane.xlu0 %284
    %286 = vadd.xlane.f32.xlu0 %v248
    %v287 = vpop.xlane.xlu0 %286
    %288 = vadd.xlane.f32.xlu0 %v251
    %v289 = vpop.xlane.xlu0 %288
    %290 = vadd.xlane.f32.xlu0 %v253
    %v291 = vpop.xlane.xlu0 %290
    %292 = vadd.xlane.f32.xlu0 %v256
    %v293 = vpop.xlane.xlu0 %292
    %294 = vadd.xlane.f32.xlu0 %v258
    %v295 = vpop.xlane.xlu0 %294
    %296 = vadd.xlane.f32.xlu0 %v261
    %v297 = vpop.xlane.xlu0 %296
    %298 = vadd.xlane.f32.xlu0 %v263
    %v299 = vpop.xlane.xlu0 %298
    %300 = vadd.xlane.f32.xlu0 %v266
    %v301 = vpop.xlane.xlu0 %300
    %302 = vadd.xlane.f32.xlu0 %v268
    %v303 = vpop.xlane.xlu0 %302
    %304 = vadd.xlane.f32.xlu0 %v271
    %v305 = vpop.xlane.xlu0 %304
    %306 = vadd.xlane.f32.xlu0 %v273
    %v307 = vpop.xlane.xlu0 %306
    %308 = vadd.xlane.f32.xlu0 %v276
    %v309 = vpop.xlane.xlu0 %308
    %310 = vadd.xlane.f32.xlu0 %v278
    %v311 = vpop.xlane.xlu0 %310
    %v312 = vmul.f32 %v281, 0.015625
    %v313 = vmul.f32 %v283, 0.015625
    %v314 = vmul.f32 %v285, 0.015625
    %v315 = vmul.f32 %v287, 0.015625
    %v316 = vmul.f32 %v289, 0.015625
    %v317 = vmul.f32 %v291, 0.015625
    %v318 = vmul.f32 %v293, 0.015625
    %v319 = vmul.f32 %v295, 0.015625
    %v320 = vmul.f32 %v297, 0.015625
    %v321 = vmul.f32 %v299, 0.015625
    %v322 = vmul.f32 %v301, 0.015625
    %v323 = vmul.f32 %v303, 0.015625
    %v324 = vmul.f32 %v305, 0.015625
    %v325 = vmul.f32 %v307, 0.015625
    %v326 = vmul.f32 %v309, 0.015625
    %v327 = vmul.f32 %v311, 0.015625
    %v328 = vsub.f32 %v241, %v312
    %v329 = vsub.f32 %v243, %v313
    %v330 = vsub.f32 %v246, %v314
    %v331 = vsub.f32 %v248, %v315
    %v332 = vsub.f32 %v251, %v316
    %v333 = vsub.f32 %v253, %v317
    %v334 = vsub.f32 %v256, %v318
    %v335 = vsub.f32 %v258, %v319
    %v336 = vsub.f32 %v261, %v320
    %v337 = vsub.f32 %v263, %v321
    %v338 = vsub.f32 %v266, %v322
    %v339 = vsub.f32 %v268, %v323
    %v340 = vsub.f32 %v271, %v324
    %v341 = vsub.f32 %v273, %v325
    %v342 = vsub.f32 %v276, %v326
    %v343 = vsub.f32 %v278, %v327
    %v344 = vmul.f32 %v328, %v328
    %v345 = vmul.f32 %v329, %v329
    %v346 = vmul.f32 %v330, %v330
    %v347 = vmul.f32 %v331, %v331
    %v348 = vmul.f32 %v332, %v332
    %v349 = vmul.f32 %v333, %v333
    %v350 = vmul.f32 %v334, %v334
    %v351 = vmul.f32 %v335, %v335
    %v352 = vmul.f32 %v336, %v336
    %v353 = vmul.f32 %v337, %v337
    %v354 = vmul.f32 %v338, %v338
    %v355 = vmul.f32 %v339, %v339
    %v356 = vmul.f32 %v340, %v340
    %v357 = vmul.f32 %v341, %v341
    %v358 = vmul.f32 %v342, %v342
    %v359 = vmul.f32 %v343, %v343
    %360 = vadd.xlane.f32.xlu0 %v344
    %v361 = vpop.xlane.xlu0 %360
    %362 = vadd.xlane.f32.xlu0 %v345
    %v363 = vpop.xlane.xlu0 %362
    %364 = vadd.xlane.f32.xlu0 %v346
    %v365 = vpop.xlane.xlu0 %364
    %366 = vadd.xlane.f32.xlu0 %v347
    %v367 = vpop.xlane.xlu0 %366
    %368 = vadd.xlane.f32.xlu0 %v348
    %v369 = vpop.xlane.xlu0 %368
    %370 = vadd.xlane.f32.xlu0 %v349
    %v371 = vpop.xlane.xlu0 %370
    %372 = vadd.xlane.f32.xlu0 %v350
    %v373 = vpop.xlane.xlu0 %372
    %374 = vadd.xlane.f32.xlu0 %v351
    %v375 = vpop.xlane.xlu0 %374
    %376 = vadd.xlane.f32.xlu0 %v352
    %v377 = vpop.xlane.xlu0 %376
    %378 = vadd.xlane.f32.xlu0 %v353
    %v379 = vpop.xlane.xlu0 %378
    %380 = vadd.xlane.f32.xlu0 %v354
    %v381 = vpop.xlane.xlu0 %380
    %382 = vadd.xlane.f32.xlu0 %v355
    %v383 = vpop.xlane.xlu0 %382
    %384 = vadd.xlane.f32.xlu0 %v356
    %v385 = vpop.xlane.xlu0 %384
    %386 = vadd.xlane.f32.xlu0 %v357
    %v387 = vpop.xlane.xlu0 %386
    %388 = vadd.xlane.f32.xlu0 %v358
    %v389 = vpop.xlane.xlu0 %388
    %390 = vadd.xlane.f32.xlu0 %v359
    %v391 = vpop.xlane.xlu0 %390
    %v392 = vmul.f32 %v312, 64.0
    %v393 = vmul.f32 %v313, 64.0
    %v394 = vmul.f32 %v314, 64.0
    %v395 = vmul.f32 %v315, 64.0
    %v396 = vmul.f32 %v316, 64.0
    %v397 = vmul.f32 %v317, 64.0
    %v398 = vmul.f32 %v318, 64.0
    %v399 = vmul.f32 %v319, 64.0
    %v400 = vmul.f32 %v320, 64.0
    %v401 = vmul.f32 %v321, 64.0
    %v402 = vmul.f32 %v322, 64.0
    %v403 = vmul.f32 %v323, 64.0
    %v404 = vmul.f32 %v324, 64.0
    %v405 = vmul.f32 %v325, 64.0
    %v406 = vmul.f32 %v326, 64.0
    %v407 = vmul.f32 %v327, 64.0
    %v408 = vmul.f32 %v392, %v312
    %v409 = vmul.f32 %v393, %v313
    %v410 = vmul.f32 %v394, %v314
    %v411 = vmul.f32 %v395, %v315
    %v412 = vmul.f32 %v396, %v316
    %v413 = vmul.f32 %v397, %v317
    %v414 = vmul.f32 %v398, %v318
    %v415 = vmul.f32 %v399, %v319
    %v416 = vmul.f32 %v400, %v320
    %v417 = vmul.f32 %v401, %v321
    %v418 = vmul.f32 %v402, %v322
    %v419 = vmul.f32 %v403, %v323
    %v420 = vmul.f32 %v404, %v324
    %v421 = vmul.f32 %v405, %v325
    %v422 = vmul.f32 %v406, %v326
    %v423 = vmul.f32 %v407, %v327
    %v424 = vsub.f32 %v361, %v408
    %v425 = vsub.f32 %v363, %v409
    %v426 = vsub.f32 %v365, %v410
    %v427 = vsub.f32 %v367, %v411
    %v428 = vsub.f32 %v369, %v412
    %v429 = vsub.f32 %v371, %v413
    %v430 = vsub.f32 %v373, %v414
    %v431 = vsub.f32 %v375, %v415
    %v432 = vsub.f32 %v377, %v416
    %v433 = vsub.f32 %v379, %v417
    %v434 = vsub.f32 %v381, %v418
    %v435 = vsub.f32 %v383, %v419
    %v436 = vsub.f32 %v385, %v420
    %v437 = vsub.f32 %v387, %v421
    %v438 = vsub.f32 %v389, %v422
    %v439 = vsub.f32 %v391, %v423
    %v440 = vmul.f32 %v424, 0.015625
    %v441 = vmul.f32 %v425, 0.015625
    %v442 = vmul.f32 %v426, 0.015625
    %v443 = vmul.f32 %v427, 0.015625
    %v444 = vmul.f32 %v428, 0.015625
    %v445 = vmul.f32 %v429, 0.015625
    %v446 = vmul.f32 %v430, 0.015625
    %v447 = vmul.f32 %v431, 0.015625
    %v448 = vmul.f32 %v432, 0.015625
    %v449 = vmul.f32 %v433, 0.015625
    %v450 = vmul.f32 %v434, 0.015625
    %v451 = vmul.f32 %v435, 0.015625
    %v452 = vmul.f32 %v436, 0.015625
    %v453 = vmul.f32 %v437, 0.015625
    %v454 = vmul.f32 %v438, 0.015625
    %v455 = vmul.f32 %v439, 0.015625
    %v456 = vmax.f32 %v440, 0.0
    %v457 = vmax.f32 %v441, 0.0
    %v458 = vmax.f32 %v442, 0.0
    %v459 = vmax.f32 %v443, 0.0
    %v460 = vmax.f32 %v444, 0.0
    %v461 = vmax.f32 %v445, 0.0
    %v462 = vmax.f32 %v446, 0.0
    %v463 = vmax.f32 %v447, 0.0
    %v464 = vmax.f32 %v448, 0.0
    %v465 = vmax.f32 %v449, 0.0
    %v466 = vmax.f32 %v450, 0.0
    %v467 = vmax.f32 %v451, 0.0
    %v468 = vmax.f32 %v452, 0.0
    %v469 = vmax.f32 %v453, 0.0
    %v470 = vmax.f32 %v454, 0.0
    %v471 = vmax.f32 %v455, 0.0
    %v472 = vadd.f32 %v456, 1e-05
    %v473 = vadd.f32 %v457, 1e-05
    %v474 = vadd.f32 %v458, 1e-05
    %v475 = vadd.f32 %v459, 1e-05
    %v476 = vadd.f32 %v460, 1e-05
    %v477 = vadd.f32 %v461, 1e-05
    %v478 = vadd.f32 %v462, 1e-05
    %v479 = vadd.f32 %v463, 1e-05
    %v480 = vadd.f32 %v464, 1e-05
    %v481 = vadd.f32 %v465, 1e-05
    %v482 = vadd.f32 %v466, 1e-05
    %v483 = vadd.f32 %v467, 1e-05
    %v484 = vadd.f32 %v468, 1e-05
    %v485 = vadd.f32 %v469, 1e-05
    %v486 = vadd.f32 %v470, 1e-05
    %v487 = vadd.f32 %v471, 1e-05
    %v488 = vrsqrt.pop %v472
    %v489 = vmul.f32 %v488, %v472
    %v490 = vmul.f32 %v489, %v488
    %v491 = vmul.f32 0.5, %v490
    %v492 = vsub.f32 1.5, %v491
    %v493 = vmul.f32 %v488, %v492
    %vm494 = vweird.f32 %v472
    %vm495 = vweird.f32 %v488
    %vm496 = vmor %vm494, %vm495
    %v497 = vsel %vm496, %v488, %v493
    %v498 = vrsqrt.pop %v473
    %v499 = vmul.f32 %v498, %v473
    %v500 = vmul.f32 %v499, %v498
    %v501 = vmul.f32 0.5, %v500
    %v502 = vsub.f32 1.5, %v501
    %v503 = vmul.f32 %v498, %v502
    %vm504 = vweird.f32 %v473
    %vm505 = vweird.f32 %v498
    %vm506 = vmor %vm504, %vm505
    %v507 = vsel %vm506, %v498, %v503
    %v508 = vrsqrt.pop %v474
    %v509 = vmul.f32 %v508, %v474
    %v510 = vmul.f32 %v509, %v508
    %v511 = vmul.f32 0.5, %v510
    %v512 = vsub.f32 1.5, %v511
    %v513 = vmul.f32 %v508, %v512
    %vm514 = vweird.f32 %v474
    %vm515 = vweird.f32 %v508
    %vm516 = vmor %vm514, %vm515
    %v517 = vsel %vm516, %v508, %v513
    %v518 = vrsqrt.pop %v475
    %v519 = vmul.f32 %v518, %v475
    %v520 = vmul.f32 %v519, %v518
    %v521 = vmul.f32 0.5, %v520
    %v522 = vsub.f32 1.5, %v521
    %v523 = vmul.f32 %v518, %v522
    %vm524 = vweird.f32 %v475
    %vm525 = vweird.f32 %v518
    %vm526 = vmor %vm524, %vm525
    %v527 = vsel %vm526, %v518, %v523
    %v528 = vrsqrt.pop %v476
    %v529 = vmul.f32 %v528, %v476
    %v530 = vmul.f32 %v529, %v528
    %v531 = vmul.f32 0.5, %v530
    %v532 = vsub.f32 1.5, %v531
    %v533 = vmul.f32 %v528, %v532
    %vm534 = vweird.f32 %v476
    %vm535 = vweird.f32 %v528
    %vm536 = vmor %vm534, %vm535
    %v537 = vsel %vm536, %v528, %v533
    %v538 = vrsqrt.pop %v477
    %v539 = vmul.f32 %v538, %v477
    %v540 = vmul.f32 %v539, %v538
    %v541 = vmul.f32 0.5, %v540
    %v542 = vsub.f32 1.5, %v541
    %v543 = vmul.f32 %v538, %v542
    %vm544 = vweird.f32 %v477
    %vm545 = vweird.f32 %v538
    %vm546 = vmor %vm544, %vm545
    %v547 = vsel %vm546, %v538, %v543
    %v548 = vrsqrt.pop %v478
    %v549 = vmul.f32 %v548, %v478
    %v550 = vmul.f32 %v549, %v548
    %v551 = vmul.f32 0.5, %v550
    %v552 = vsub.f32 1.5, %v551
    %v553 = vmul.f32 %v548, %v552
    %vm554 = vweird.f32 %v478
    %vm555 = vweird.f32 %v548
    %vm556 = vmor %vm554, %vm555
    %v557 = vsel %vm556, %v548, %v553
    %v558 = vrsqrt.pop %v479
    %v559 = vmul.f32 %v558, %v479
    %v560 = vmul.f32 %v559, %v558
    %v561 = vmul.f32 0.5, %v560
    %v562 = vsub.f32 1.5, %v561
    %v563 = vmul.f32 %v558, %v562
    %vm564 = vweird.f32 %v479
    %vm565 = vweird.f32 %v558
    %vm566 = vmor %vm564, %vm565
    %v567 = vsel %vm566, %v558, %v563
    %v568 = vrsqrt.pop %v480
    %v569 = vmul.f32 %v568, %v480
    %v570 = vmul.f32 %v569, %v568
    %v571 = vmul.f32 0.5, %v570
    %v572 = vsub.f32 1.5, %v571
    %v573 = vmul.f32 %v568, %v572
    %vm574 = vweird.f32 %v480
    %vm575 = vweird.f32 %v568
    %vm576 = vmor %vm574, %vm575
    %v577 = vsel %vm576, %v568, %v573
    %v578 = vrsqrt.pop %v481
    %v579 = vmul.f32 %v578, %v481
    %v580 = vmul.f32 %v579, %v578
    %v581 = vmul.f32 0.5, %v580
    %v582 = vsub.f32 1.5, %v581
    %v583 = vmul.f32 %v578, %v582
    %vm584 = vweird.f32 %v481
    %vm585 = vweird.f32 %v578
    %vm586 = vmor %vm584, %vm585
    %v587 = vsel %vm586, %v578, %v583
    %v588 = vrsqrt.pop %v482
    %v589 = vmul.f32 %v588, %v482
    %v590 = vmul.f32 %v589, %v588
    %v591 = vmul.f32 0.5, %v590
    %v592 = vsub.f32 1.5, %v591
    %v593 = vmul.f32 %v588, %v592
    %vm594 = vweird.f32 %v482
    %vm595 = vweird.f32 %v588
    %vm596 = vmor %vm594, %vm595
    %v597 = vsel %vm596, %v588, %v593
    %v598 = vrsqrt.pop %v483
    %v599 = vmul.f32 %v598, %v483
    %v600 = vmul.f32 %v599, %v598
    %v601 = vmul.f32 0.5, %v600
    %v602 = vsub.f32 1.5, %v601
    %v603 = vmul.f32 %v598, %v602
    %vm604 = vweird.f32 %v483
    %vm605 = vweird.f32 %v598
    %vm606 = vmor %vm604, %vm605
    %v607 = vsel %vm606, %v598, %v603
    %v608 = vrsqrt.pop %v484
    %v609 = vmul.f32 %v608, %v484
    %v610 = vmul.f32 %v609, %v608
    %v611 = vmul.f32 0.5, %v610
    %v612 = vsub.f32 1.5, %v611
    %v613 = vmul.f32 %v608, %v612
    %vm614 = vweird.f32 %v484
    %vm615 = vweird.f32 %v608
    %vm616 = vmor %vm614, %vm615
    %v617 = vsel %vm616, %v608, %v613
    %v618 = vrsqrt.pop %v485
    %v619 = vmul.f32 %v618, %v485
    %v620 = vmul.f32 %v619, %v618
    %v621 = vmul.f32 0.5, %v620
    %v622 = vsub.f32 1.5, %v621
    %v623 = vmul.f32 %v618, %v622
    %vm624 = vweird.f32 %v485
    %vm625 = vweird.f32 %v618
    %vm626 = vmor %vm624, %vm625
    %v627 = vsel %vm626, %v618, %v623
    %v628 = vrsqrt.pop %v486
    %v629 = vmul.f32 %v628, %v486
    %v630 = vmul.f32 %v629, %v628
    %v631 = vmul.f32 0.5, %v630
    %v632 = vsub.f32 1.5, %v631
    %v633 = vmul.f32 %v628, %v632
    %vm634 = vweird.f32 %v486
    %vm635 = vweird.f32 %v628
    %vm636 = vmor %vm634, %vm635
    %v637 = vsel %vm636, %v628, %v633
    %v638 = vrsqrt.pop %v487
    %v639 = vmul.f32 %v638, %v487
    %v640 = vmul.f32 %v639, %v638
    %v641 = vmul.f32 0.5, %v640
    %v642 = vsub.f32 1.5, %v641
    %v643 = vmul.f32 %v638, %v642
    %vm644 = vweird.f32 %v487
    %vm645 = vweird.f32 %v638
    %vm646 = vmor %vm644, %vm645
    %v647 = vsel %vm646, %v638, %v643
    %v648 = vmul.f32 %v328, %v497
    %v649 = vmul.f32 %v329, %v507
    %v650 = vmul.f32 %v330, %v517
    %v651 = vmul.f32 %v331, %v527
    %v652 = vmul.f32 %v332, %v537
    %v653 = vmul.f32 %v333, %v547
    %v654 = vmul.f32 %v334, %v557
    %v655 = vmul.f32 %v335, %v567
    %v656 = vmul.f32 %v336, %v577
    %v657 = vmul.f32 %v337, %v587
    %v658 = vmul.f32 %v338, %v597
    %v659 = vmul.f32 %v339, %v607
    %v660 = vmul.f32 %v340, %v617
    %v661 = vmul.f32 %v341, %v627
    %v662 = vmul.f32 %v342, %v637
    %v663 = vmul.f32 %v343, %v647
    %v664 = vld [vmem:[%s2] sm:$0x1]
    %v666 = vperm.slane %v664, 0
    %v668 = vmul.f32 %v648, %v666
    %v669 = vmul.f32 %v649, %v666
    %v670 = vmul.f32 %v650, %v666
    %v671 = vmul.f32 %v651, %v666
    %v672 = vmul.f32 %v652, %v666
    %v673 = vmul.f32 %v653, %v666
    %v674 = vmul.f32 %v654, %v666
    %v675 = vmul.f32 %v655, %v666
    %v676 = vmul.f32 %v656, %v666
    %v677 = vmul.f32 %v657, %v666
    %v678 = vmul.f32 %v658, %v666
    %v679 = vmul.f32 %v659, %v666
    %v680 = vmul.f32 %v660, %v666
    %v681 = vmul.f32 %v661, %v666
    %v682 = vmul.f32 %v662, %v666
    %v683 = vmul.f32 %v663, %v666
    %v684 = vld [vmem:[%s3] sm:$0x1]
    %v686 = vperm.slane %v684, 0
    %v688 = vadd.f32 %v668, %v686
    %v689 = vadd.f32 %v669, %v686
    %v690 = vadd.f32 %v670, %v686
    %v691 = vadd.f32 %v671, %v686
    %v692 = vadd.f32 %v672, %v686
    %v693 = vadd.f32 %v673, %v686
    %v694 = vadd.f32 %v674, %v686
    %v695 = vadd.f32 %v675, %v686
    %v696 = vadd.f32 %v676, %v686
    %v697 = vadd.f32 %v677, %v686
    %v698 = vadd.f32 %v678, %v686
    %v699 = vadd.f32 %v679, %v686
    %v700 = vadd.f32 %v680, %v686
    %v701 = vadd.f32 %v681, %v686
    %v702 = vadd.f32 %v682, %v686
    %v703 = vadd.f32 %v683, %v686
    %v704 = vpack.c.bf16 %v688, %v688
    %v705 = vpack.c.bf16 %v689, %v689
    %v706 = vpack.c.bf16 %v690, %v690
    %v707 = vpack.c.bf16 %v691, %v691
    %v708 = vpack.c.bf16 %v692, %v692
    %v709 = vpack.c.bf16 %v693, %v693
    %v710 = vpack.c.bf16 %v694, %v694
    %v711 = vpack.c.bf16 %v695, %v695
    %v712 = vpack.c.bf16 %v696, %v696
    %v713 = vpack.c.bf16 %v697, %v697
    %v714 = vpack.c.bf16 %v698, %v698
    %v715 = vpack.c.bf16 %v699, %v699
    %v716 = vpack.c.bf16 %v700, %v700
    %v717 = vpack.c.bf16 %v701, %v701
    %v718 = vpack.c.bf16 %v702, %v702
    %v719 = vpack.c.bf16 %v703, %v703
    %720 = vst [vmem:[#allocation2] sm:$0xf] %v704
    %721 = vst [vmem:[#allocation2 + $0x4] sm:$0xf] %v705
    %722 = vst [vmem:[#allocation2 + $0x8] sm:$0xf] %v706
    %723 = vst [vmem:[#allocation2 + $0xc] sm:$0xf] %v707
    %724 = vst [vmem:[#allocation2 + $0x10] sm:$0xf] %v708
    %725 = vst [vmem:[#allocation2 + $0x14] sm:$0xf] %v709
    %726 = vst [vmem:[#allocation2 + $0x18] sm:$0xf] %v710
    %727 = vst [vmem:[#allocation2 + $0x1c] sm:$0xf] %v711
    %728 = vst [vmem:[#allocation2 + $0x20] sm:$0xf] %v712
    %729 = vst [vmem:[#allocation2 + $0x24] sm:$0xf] %v713
    %730 = vst [vmem:[#allocation2 + $0x28] sm:$0xf] %v714
    %731 = vst [vmem:[#allocation2 + $0x2c] sm:$0xf] %v715
    %732 = vst [vmem:[#allocation2 + $0x30] sm:$0xf] %v716
    %733 = vst [vmem:[#allocation2 + $0x34] sm:$0xf] %v717
    %734 = vst [vmem:[#allocation2 + $0x38] sm:$0xf] %v718
    %735 = vst [vmem:[#allocation2 + $0x3c] sm:$0xf] %v719
    // Predicated region
    $region18: #{a_call__.1} parent=1 // pred_check
      _
    $region19: #{a_call__.1} parent=1 // pred_check_branch
      %737 = sbr.rel (0) target = $region21
    $region20: #{a_call__.1} parent=1 // pred_region
      %739 = vsyncadd [#allocation3], 0
      %s740 = sshll.u32 [#allocation2], 4
      %s741 = int_to_ptr.vmem [resolvable:$true] %s740
      %s742 = sshll.u32 %s4, 4
      %s743 = int_to_ptr.hbm [resolvable:$true] %s742
      %748 = dma.vmem_to_hbm [thread:$0]  %s741, 1024, %s743, [#allocation3], 64, 64, 4
    $region21: #{a_call__.1} parent=1 // pred_fallthru
      _
    // Predicated region
    $region22: #{a_call__.1} parent=1 // pred_check
      _
    $region23: #{a_call__.1} parent=1 // pred_check_branch
      %750 = sbr.rel (0) target = $region25
    $region24: #{a_call__.1} parent=1 // pred_region
      %752 = dma.done [#allocation3], 1024
    $region25: #{a_call__.1} parent=1 // pred_fallthru
      _
    %753 = vsyncpa [#allocation3], 1

</llo_original>
